<compile_context>
chip_gen: v7x
topology: tpu7x:2x2x1
jax: 0.10.0
libtpu: 0.0.40
codegen_flags: <defaults>
</compile_context>

<pallas_src>
import math
import numpy as np
import jax
import jax.numpy as jnp
from jax import lax
from jax.experimental import pallas as pl
from jax.experimental.pallas import tpu as pltpu


def _round_up(x, m):
    return -(-x // m) * m


def _trainer_kernel(coef_ref, w_ref, x0_ref, noise_ref, loss_ref):
    # coef_ref : (R, 3)       per-row [sqrt_ab[t], sqrt_1m_ab[t], bias]
    # w_ref    : (G, G)       resident channel-mix weight, G = lcm(8, C)
    # x0_ref   : (R, L)       R rows of the flattened (B*C, HW) image, L lanes
    # noise_ref: (R, L)
    # loss_ref : (R, L)
    group = w_ref.shape[0]
    n_groups = x0_ref.shape[0] // group
    w = w_ref[...]                               # tiny, stays in vregs

    def body(g, carry):
        r0 = pl.multiple_of(g * group, group)    # 8-aligned sublane offset
        rows = pl.ds(r0, group)

        coef = coef_ref[rows, :]                 # (G, 3)
        a = coef[:, 0:1]
        s = coef[:, 1:2]
        bias = coef[:, 2:3]

        noise = noise_ref[rows, :]               # (G, L)
        # forward diffusion: x_t = a * x_0 + s * noise   (VPU, vreg-aligned slabs)
        x_t = a * x0_ref[rows, :] + s * noise

        # synthetic model: per-sample 1x1 conv as a tiny (G,G)@(G,L) MXU matmul
        # (block-diagonal within the group, so mixed real/padded groups stay exact)
        pred = jnp.dot(w, x_t,
                       preferred_element_type=jnp.float32,
                       precision=lax.Precision.HIGHEST) + bias

        # mse_loss(reduction='none')
        diff = pred - noise
        loss_ref[rows, :] = (diff * diff).astype(loss_ref.dtype)
        return carry

    unroll = n_groups if n_groups <= 8 else 8
    lax.fori_loop(0, n_groups, body, 0, unroll=unroll)


def _pick_lane_tile(hw, max_lane=1024, min_lane=512):
    """Lane tile: multiple of 128 dividing hw (capped for vreg pressure), or full hw."""
    if hw <= max_lane or hw % 128 != 0:
        return hw
    divs = [d for d in range(128, max_lane + 1, 128) if hw % d == 0]
    good = [d for d in divs if d >= min_lane]
    if good:
        return max(good)
    return max(divs) if divs else hw


def _pick_row_tile(rows, group, lane_bytes, target_block_bytes=2 << 20, max_rows=1024):
    """Row tile R (multiple of `group`) targeting ~2 MiB blocks; prefer an even
    chunk count (v7x two-TensorCore balance) and minimal zero-padding."""
    rows_g = _round_up(rows, group)
    budget_rows = max(group, (target_block_bytes // lane_bytes) // group * group)
    cap_rows = max(group, (max_rows // group) * group)
    r_cap = min(rows_g, budget_rows, cap_rows)

    best_key, best = None, None
    r = r_cap
    while r >= group and r >= r_cap // 2:
        rows_pad = _round_up(rows_g, r)
        n_chunks = rows_pad // r
        key = (0 if (n_chunks % 2 == 0 or n_chunks == 1) else 1,   # even chunk count
               rows_pad - rows_g,                                  # minimal padding
               -r)                                                 # biggest blocks
        if best_key is None or key < best_key:
            best_key, best = key, (r, rows_pad)
        r -= group
    return best


def gaussian_diffusion_trainer_loss(x_0, t, noise, sqrt_ab, sqrt_1mab, w, bias_table):
    """Pallas-backed forward of GaussianDiffusionTrainer (loss, reduction='none')."""
    B, C, H, W = x_0.shape
    HW = H * W
    rows = B * C

    # Rows handled by one channel-mix matmul: smallest multiple of C that is also
    # a multiple of 8 (sublane alignment).  For C=4 this is 8 -> kron(I_2, w),
    # only 2x the useful FLOPs (vs. up to chunk_b x for the old block-diagonal).
    group = (8 * C) // math.gcd(8, C)
    reps = group // C

    L = _pick_lane_tile(HW)
    R, rows_pad = _pick_row_tile(rows, group, L * x_0.dtype.itemsize)
    pad = rows_pad - rows

    x0_flat = x_0.reshape(rows, HW).astype(jnp.float32)
    noise_flat = noise.reshape(rows, HW).astype(jnp.float32)

    # extract(): gather per-sample schedule coefficients and the synthetic model's
    # per-timestep bias on tiny (B,)/(B,C) arrays, packed into one lane-packed
    # (B*C, 3) side input -> one small aligned DMA per row-chunk.
    a_rows = jnp.repeat(sqrt_ab[t].astype(jnp.float32), C)          # (B*C,)
    s_rows = jnp.repeat(sqrt_1mab[t].astype(jnp.float32), C)        # (B*C,)
    bias_rows = bias_table[t].astype(jnp.float32).reshape(rows)     # (B*C,)
    coef = jnp.stack([a_rows, s_rows, bias_rows], axis=-1)          # (B*C, 3)

    if pad:
        # Zero-padded rows: a = s = bias = 0 -> x_t = 0, pred = 0, loss = 0;
        # block-diagonal group weight keeps real rows independent of padding.
        x0_flat = jnp.pad(x0_flat, ((0, pad), (0, 0)))
        noise_flat = jnp.pad(noise_flat, ((0, pad), (0, 0)))
        coef = jnp.pad(coef, ((0, pad), (0, 0)))

    # Tiny resident group weight (group x group, e.g. 8x8 = 256 B).
    w_g = jnp.kron(jnp.eye(reps, dtype=jnp.float32), w.astype(jnp.float32))

    grid = (rows_pad // R, HW // L)

    out = pl.pallas_call(
        _trainer_kernel,
        out_shape=jax.ShapeDtypeStruct((rows_pad, HW), jnp.float32),
        grid=grid,
        in_specs=[
            pl.BlockSpec((R, 3), lambda i, j: (i, 0)),            # packed coefficients
            pl.BlockSpec((group, group), lambda i, j: (0, 0)),    # resident weight
            pl.BlockSpec((R, L), lambda i, j: (i, j)),            # x_0
            pl.BlockSpec((R, L), lambda i, j: (i, j)),            # noise
        ],
        out_specs=pl.BlockSpec((R, L), lambda i, j: (i, j)),      # loss
        compiler_params=pltpu.CompilerParams(
            dimension_semantics=("parallel", "parallel")),
    )(coef, w_g, x0_flat, noise_flat)

    if pad:
        out = out[:rows]
    return out.reshape(B, C, H, W)


def make_diffusion_buffers(beta_1, beta_T, T):
    """Deterministic buffers matching the PyTorch __init__ (double-precision setup)."""
    betas = np.linspace(beta_1, beta_T, T, dtype=np.float64)
    alphas = 1.0 - betas
    alphas_bar = np.cumprod(alphas, axis=0)
    sqrt_ab = np.sqrt(alphas_bar).astype(np.float32)            # .float() in extract()
    sqrt_1mab = np.sqrt(1.0 - alphas_bar).astype(np.float32)
    return jnp.asarray(sqrt_ab), jnp.asarray(sqrt_1mab)


def _reference(x_0, t, noise, sqrt_ab, sqrt_1mab, w, bias_table):
    B = x_0.shape[0]
    a = sqrt_ab[t].reshape(B, 1, 1, 1)
    s = sqrt_1mab[t].reshape(B, 1, 1, 1)
    x_t = a * x_0 + s * noise
    pred = jnp.einsum('oc,bchw->bohw', w, x_t,
                      precision=jax.lax.Precision.HIGHEST) \
        + bias_table[t][:, :, None, None]
    return (pred - noise) ** 2


if __name__ == "__main__":
    B, C, H, W = 2, 4, 16, 16
    T = 16
    beta_1, beta_T = 1e-4, 0.02

    key = jax.random.PRNGKey(0)
    k_x0, k_t, k_noise, k_w, k_bias = jax.random.split(key, 5)

    # Inputs / module randomness (generated in glue; deterministic via PRNGKey(0)).
    # TODO(synk): PyTorch uses torch RNG (randint/randn_like); we use jax.random instead.
    x_0 = jax.random.normal(k_x0, (B, C, H, W), dtype=jnp.float32)
    t = jax.random.randint(k_t, (B,), 0, T, dtype=jnp.int32)
    noise = jax.random.normal(k_noise, (B, C, H, W), dtype=jnp.float32)

    # Diffusion schedule buffers (as registered in __init__).
    sqrt_ab, sqrt_1mab = make_diffusion_buffers(beta_1, beta_T, T)

    # Deterministic synthetic model parameters (1x1 conv weight + timestep bias table).
    # TODO(synk): the module's `model` is an arbitrary nn.Module (e.g. a UNet);
    # it is replaced here by this synthetic channel-mix + timestep-bias model.
    w = 0.1 * jax.random.normal(k_w, (C, C), dtype=jnp.float32)
    bias_table = 0.1 * jax.random.normal(k_bias, (T, C), dtype=jnp.float32)

    loss = gaussian_diffusion_trainer_loss(x_0, t, noise, sqrt_ab, sqrt_1mab, w, bias_table)
    loss = jax.block_until_ready(loss)

    ref = _reference(x_0, t, noise, sqrt_ab, sqrt_1mab, w, bias_table)
    assert loss.shape == (B, C, H, W), loss.shape
    np.testing.assert_allclose(np.asarray(loss), np.asarray(ref), rtol=1e-5, atol=1e-5)

    print("KERNEL_OK")
</pallas_src>

<mosaic_0001>
module attributes {stable_mosaic.version = 11 : i64} {
  func.func @_trainer_kernel(%arg0: i32, %arg1: i32, %arg2: memref<8x3xf32, #tpu.memory_space<vmem>>, %arg3: memref<8x8xf32, #tpu.memory_space<vmem>>, %arg4: memref<8x256xf32, #tpu.memory_space<vmem>>, %arg5: memref<8x256xf32, #tpu.memory_space<vmem>>, %arg6: memref<8x256xf32, #tpu.memory_space<vmem>>) attributes {dimension_semantics = [#tpu.dimension_semantics<parallel>, #tpu.dimension_semantics<parallel>], iteration_bounds = array<i64: 1, 1>, scalar_prefetch = 0 : i64, scratch_operands = 0 : i64, tpu.core_type = #tpu.core_type<tc>, window_params = [{transform_indices = @transform_0, window_bounds = array<i64: 8, 3>}, {pipeline_mode = #tpu.pipeline_mode<synchronous>, transform_indices = @transform_1, window_bounds = array<i64: 8, 8>}, {transform_indices = @transform_2, window_bounds = array<i64: 8, 256>}, {transform_indices = @transform_3, window_bounds = array<i64: 8, 256>}, {transform_indices = @transform_4, window_bounds = array<i64: 8, 256>}]} {
    %c0 = arith.constant 0 : index
    %c0_0 = arith.constant 0 : index
    %0 = vector.load %arg3[%c0, %c0_0] : memref<8x8xf32, #tpu.memory_space<vmem>>, vector<8x8xf32>
    %c0_i32 = arith.constant 0 : i32
    %c8_i32 = arith.constant 8 : i32
    %1 = arith.muli %c0_i32, %c8_i32 : i32
    %2 = tpu.assume_multiple %1, 8 : i32
    %3 = arith.index_cast %2 : i32 to index
    %c0_1 = arith.constant 0 : index
    %4 = vector.load %arg2[%3, %c0_1] : memref<8x3xf32, #tpu.memory_space<vmem>>, vector<8x3xf32>
    %5 = vector.extract_strided_slice %4 {offsets = [0, 0], sizes = [8, 1], strides = [1, 1]} : vector<8x3xf32> to vector<8x1xf32>
    %6 = vector.extract_strided_slice %4 {offsets = [0, 1], sizes = [8, 1], strides = [1, 1]} : vector<8x3xf32> to vector<8x1xf32>
    %7 = vector.extract_strided_slice %4 {offsets = [0, 2], sizes = [8, 1], strides = [1, 1]} : vector<8x3xf32> to vector<8x1xf32>
    %8 = arith.index_cast %2 : i32 to index
    %c0_2 = arith.constant 0 : index
    %9 = vector.load %arg5[%8, %c0_2] : memref<8x256xf32, #tpu.memory_space<vmem>>, vector<8x256xf32>
    %10 = arith.index_cast %2 : i32 to index
    %c0_3 = arith.constant 0 : index
    %11 = vector.load %arg4[%10, %c0_3] : memref<8x256xf32, #tpu.memory_space<vmem>>, vector<8x256xf32>
    %12 = vector.broadcast %5 : vector<8x1xf32> to vector<8x256xf32>
    %13 = arith.mulf %12, %11 : vector<8x256xf32>
    %14 = vector.broadcast %6 : vector<8x1xf32> to vector<8x256xf32>
    %15 = arith.mulf %14, %9 : vector<8x256xf32>
    %16 = arith.addf %13, %15 : vector<8x256xf32>
    %cst = arith.constant dense<0.000000e+00> : vector<8x256xf32>
    %17 = tpu.matmul %0, %16, %cst {dimension_numbers = #tpu.dot_dimension_numbers<[1], [0], [0], [1], [0, 0, 1, 1], [], []>, precision = #tpu.contract_precision<fp32>} : vector<8x8xf32>, vector<8x256xf32>, vector<8x256xf32> -> vector<8x256xf32>
    %18 = vector.broadcast %7 : vector<8x1xf32> to vector<8x256xf32>
    %19 = arith.addf %17, %18 : vector<8x256xf32>
    %20 = arith.subf %19, %9 : vector<8x256xf32>
    %21 = arith.mulf %20, %20 : vector<8x256xf32>
    %22 = arith.index_cast %2 : i32 to index
    %c0_4 = arith.constant 0 : index
    %23 = vector.load %arg6[%22, %c0_4] : memref<8x256xf32, #tpu.memory_space<vmem>>, vector<8x256xf32>
    tpu.vector_store %arg6[%22, %c0_4], %21 {strides = array<i32>} : memref<8x256xf32, #tpu.memory_space<vmem>>, vector<8x256xf32>,
    %c1_i32 = arith.constant 1 : i32
    return
  }
  func.func @transform_0(%arg0: i32, %arg1: i32) -> (i32, i32) {
    %c0_i32 = arith.constant 0 : i32
    %c0_i32_0 = arith.constant 0 : i32
    return %arg0, %c0_i32 : i32, i32
  }
  func.func @transform_1(%arg0: i32, %arg1: i32) -> (i32, i32) {
    %c0_i32 = arith.constant 0 : i32
    %c0_i32_0 = arith.constant 0 : i32
    %c0_i32_1 = arith.constant 0 : i32
    return %c0_i32, %c0_i32_0 : i32, i32
  }
  func.func @transform_2(%arg0: i32, %arg1: i32) -> (i32, i32) {
    %c0_i32 = arith.constant 0 : i32
    return %arg0, %arg1 : i32, i32
  }
  func.func @transform_3(%arg0: i32, %arg1: i32) -> (i32, i32) {
    %c0_i32 = arith.constant 0 : i32
    return %arg0, %arg1 : i32, i32
  }
  func.func @transform_4(%arg0: i32, %arg1: i32) -> (i32, i32) {
    %c0_i32 = arith.constant 0 : i32
    return %arg0, %arg1 : i32, i32
  }
}

</mosaic_0001>

<llo_original>
// kernel: tpu_custom_call.1
$region0: #{tpu_custom_call.1}
  #allocation0 [shape = 'u32[]', space=smem, size = 0x4, offset = 0x4, fixed_abs, tag = 'smem constant byte address 0x4 - core index']
  #allocation1 [shape = 'u32[144,128]{1,0:T(1,128)}', space=vmem, size = 0x12000, scoped, tag = 'internal scratch']
  %s0 = inlined_call_operand.vmem [shape: f32[8,3], index: 0, kind: input, shape index: {}]
  %s1 = inlined_call_operand.hbm [shape: f32[8,8], index: 1, kind: input, shape index: {}]
  %s2 = inlined_call_operand.vmem [shape: f32[8,256], index: 2, kind: input, shape index: {}]
  %s3 = inlined_call_operand.hbm [shape: f32[8,256], index: 3, kind: input, shape index: {}]
  %s4 = inlined_call_operand.hbm [shape: f32[8,256], index: 4, kind: output, shape index: {}]
  %s5 = sld [smem:[#allocation0]]
  $region34: #{tpu_custom_call.1} parent=0
    _
  %s7 = ssub.s32 1, %s5
  %s8 = scalar_select 0, %s7, %s5
  $region1: #{tpu_custom_call.1} parent=0
    #allocation2 [shape = 'u8[4096]{0}', space=vmem, size = 0x1000, scoped, tag = 'input window, operand 1, single buffered']
    #allocation3 [shape = 's32[1]{0}', space=sflag, size = 0x4, scoped, tag = 'scoped memory for tpu_custom_call.1']
    #allocation4 [shape = 's32[1]{0}', space=sflag, size = 0x4, scoped, tag = 'scoped memory for tpu_custom_call.1']
    #allocation5 [shape = 'u8[8192]{0}', space=vmem, size = 0x2000, scoped, tag = 'input window, operand 3, single buffered']
    #allocation6 [shape = 's32[1]{0}', space=sflag, size = 0x4, scoped, tag = 'scoped memory for tpu_custom_call.1']
    #allocation7 [shape = 'u8[8192]{0}', space=vmem, size = 0x2000, scoped, tag = 'output window, operand 0, single buffered']
    %9 = vsyncpa [#allocation3], 0
    %10 = vsyncpa [#allocation6], 0
    %11 = vsyncpa [#allocation4], 0
    // Predicated region
    $region2: #{tpu_custom_call.1} parent=1 // pred_check
      _
    $region3: #{tpu_custom_call.1} parent=1 // pred_check_branch
      %13 = sbr.rel (0) target = $region5
    $region4: #{tpu_custom_call.1} parent=1 // pred_region
      _
    $region5: #{tpu_custom_call.1} parent=1 // pred_fallthru
      _
    // Predicated region
    $region6: #{tpu_custom_call.1} parent=1 // pred_check
      _
    $region7: #{tpu_custom_call.1} parent=1 // pred_check_branch
      %15 = sbr.rel (0) target = $region9
    $region8: #{tpu_custom_call.1} parent=1 // pred_region
      %s17 = ssub.s32 128, 128
      %18 = vsyncadd [#allocation3], %s17
      %s20 = sshll.u32 [#allocation2], 4
      %s21 = int_to_ptr.vmem [resolvable:$true] %s20
      %23 = dma.hbm_to_vmem [thread:$0]  %s1, 128, %s21, [#allocation3]
    $region9: #{tpu_custom_call.1} parent=1 // pred_fallthru
      _
    // Predicated region
    $region10: #{tpu_custom_call.1} parent=1 // pred_check
      _
    $region11: #{tpu_custom_call.1} parent=1 // pred_check_branch
      %25 = sbr.rel (0) target = $region13
    $region12: #{tpu_custom_call.1} parent=1 // pred_region
      _
    $region13: #{tpu_custom_call.1} parent=1 // pred_fallthru
      _
    // Predicated region
    $region14: #{tpu_custom_call.1} parent=1 // pred_check
      _
    $region15: #{tpu_custom_call.1} parent=1 // pred_check_branch
      %27 = sbr.rel (0) target = $region17
    $region16: #{tpu_custom_call.1} parent=1 // pred_region
      %s29 = ssub.s32 256, 256
      %30 = vsyncadd [#allocation6], %s29
      %s32 = sshll.u32 [#allocation5], 4
      %s33 = int_to_ptr.vmem [resolvable:$true] %s32
      %35 = dma.hbm_to_vmem [thread:$0]  %s3, 256, %s33, [#allocation6]
    $region17: #{tpu_custom_call.1} parent=1 // pred_fallthru
      _
    // Predicated region
    $region18: #{tpu_custom_call.1} parent=1 // pred_check
      _
    $region19: #{tpu_custom_call.1} parent=1 // pred_check_branch
      %37 = sbr.rel (0) target = $region21
    $region20: #{tpu_custom_call.1} parent=1 // pred_region
      %38 = dma.done [#allocation3], 128
    $region21: #{tpu_custom_call.1} parent=1 // pred_fallthru
      _
    // Predicated region
    $region22: #{tpu_custom_call.1} parent=1 // pred_check
      _
    $region23: #{tpu_custom_call.1} parent=1 // pred_check_branch
      %40 = sbr.rel (0) target = $region25
    $region24: #{tpu_custom_call.1} parent=1 // pred_region
      %41 = dma.done [#allocation6], 256
    $region25: #{tpu_custom_call.1} parent=1 // pred_fallthru
      _
    %v42 = vld [vmem:[#allocation2] sm:$0xff]
    %v43 = vld [vmem:[%s0] sm:$0xff]
    %s44 = smul.u32 0, 2
    %s45 = smul.addr %s44, 8
    %s46 = scalar_lea.vmem [#allocation5], %s45
    %v47 = vld [vmem:[%s46] sm:$0xff]
    %v48 = vld [vmem:[%s46 + $0x8] sm:$0xff]
    %s49 = smul.addr %s44, 8
    %s50 = scalar_lea.vmem %s2, %s49
    %v51 = vld [vmem:[%s50] sm:$0xff]
    %v52 = vld [vmem:[%s50 + $0x8] sm:$0xff]
    %54 = vset.pattern.permute.xlu0 0
    %55 = vperm.xlu0 %54, %v43
    %v56 = vpop.permute.xlu0 %55
    %v58 = vmul.f32 %v56, %v51
    %v59 = vmul.f32 %v56, %v52
    %60 = vset.pattern.permute.xlu0 1
    %61 = vperm.xlu0 %60, %v43
    %v62 = vpop.permute.xlu0 %61
    %v64 = vmul.f32 %v62, %v47
    %v65 = vmul.f32 %v62, %v48
    %v66 = vadd.f32 %v58, %v64
    %v67 = vadd.f32 %v59, %v65
    %68 = vset.pattern.permute.xlu0 2
    %69 = vperm.xlu0 %68, %v43
    %v70 = vpop.permute.xlu0 %69
    %vm72 = vcmask 64512
    %v74 = vsel %vm72, %v42, 0
    %v76 = vand.u32 %v67, 4294901760
    %77 = vmatprep.subr.mxu0 %v76
    %v78 = vand.u32 %v66, 4294901760
    %79 = vmatpush1.msra.mxu0 %v78
    %80 = vmatprep.subr.mxu0 0.0
    %81 = vmatpush1.msra.mxu0 0.0
    %82 = vmatprep.subr.mxu0 0.0
    %83 = vmatpush1.msra.mxu0 0.0
    %84 = vmatprep.subr.mxu0 0.0
    %85 = vmatpush1.msra.mxu0 0.0
    %86 = vmatprep.subr.mxu0 0.0
    %87 = vmatpush1.msra.mxu0 0.0
    %88 = vmatprep.subr.mxu0 0.0
    %89 = vmatpush1.msra.mxu0 0.0
    %90 = vmatprep.subr.mxu0 0.0
    %91 = vmatpush1.msra.mxu0 0.0
    %92 = vmatprep.subr.mxu0 0.0
    %93 = vmatpush1.msra.mxu0 0.0
    %94 = vmatprep.subr.mxu0 0.0
    %95 = vmatpush1.msra.mxu0 0.0
    %96 = vmatprep.subr.mxu0 0.0
    %97 = vmatpush1.msra.mxu0 0.0
    %98 = vmatprep.subr.mxu0 0.0
    %99 = vmatpush1.msra.mxu0 0.0
    %100 = vmatprep.subr.mxu0 0.0
    %101 = vmatpush1.msra.mxu0 0.0
    %102 = vmatprep.subr.mxu0 0.0
    %103 = vmatpush1.msra.mxu0 0.0
    %104 = vmatprep.subr.mxu0 0.0
    %105 = vmatpush1.msra.mxu0 0.0
    %106 = vmatprep.subr.mxu0 0.0
    %107 = vmatpush1.msra.mxu0 0.0
    %108 = vmatprep.subr.mxu0 0.0
    %109 = vmatpush1.msra.mxu0 0.0
    %110 = vmatprep.subr.mxu0 0.0
    %111 = vmatpush1.msra.mxu0 0.0
    %112 = vmatprep.subr.mxu0 0.0
    %113 = vmatpush1.msra.mxu0 0.0
    %114 = vmatprep.subr.mxu0 0.0
    %115 = vmatpush1.msra.mxu0 0.0
    %116 = vmatprep.subr.mxu0 0.0
    %117 = vmatpush1.msra.mxu0 0.0
    %118 = vmatprep.subr.mxu0 0.0
    %119 = vmatpush1.msra.mxu0 0.0
    %120 = vmatprep.subr.mxu0 0.0
    %121 = vmatpush1.msra.mxu0 0.0
    %122 = vmatprep.subr.mxu0 0.0
    %123 = vmatpush1.msra.mxu0 0.0
    %124 = vmatprep.subr.mxu0 0.0
    %125 = vmatpush1.msra.mxu0 0.0
    %126 = vmatprep.subr.mxu0 0.0
    %127 = vmatpush1.msra.mxu0 0.0
    %128 = vmatprep.subr.mxu0 0.0
    %129 = vmatpush1.msra.mxu0 0.0
    %130 = vmatprep.subr.mxu0 0.0
    %131 = vmatpush1.msra.mxu0 0.0
    %132 = vmatprep.subr.mxu0 0.0
    %133 = vmatpush1.msra.mxu0 0.0
    %134 = vmatprep.subr.mxu0 0.0
    %135 = vmatpush1.msra.mxu0 0.0
    %136 = vmatprep.subr.mxu0 0.0
    %137 = vmatpush1.msra.mxu0 0.0
    %138 = vmatprep.subr.mxu0 0.0
    %139 = vmatpush1.msra.mxu0 0.0
    %140 = vmatprep.subr.mxu0 0.0
    %141 = vmatpush1.msra.mxu0 0.0
    %142 = vmatprep.mubr.f32.mxu0 0.0
    %v143 = vand.u32 %v74, 4294901760
    %v144 = vsub.f32 %v74, %v143
    %v145 = vand.u32 %v144, 4294901760
    %v146 = vsub.f32 %v144, %v145
    %v147 = vand.u32 %v146, 4294901760
    %148 = vmatmul.mubr.f32.gmra.mrb[0].mxu0 %v147
    %v149 = vpop.f32.mrb[0].mxu0
    %v150 = vadd.f32 %v70, %v149
    %v151 = vpop.f32.mrb[0].mxu0
    %v152 = vadd.f32 %v70, %v151
    %153 = vdwg.mxu0
    %v154 = vand.u32 %v67, 4294901760
    %v155 = vsub.f32 %v67, %v154
    %v156 = vand.u32 %v155, 4294901760
    %v157 = vsub.f32 %v155, %v156
    %v158 = vand.u32 %v157, 4294901760
    %159 = vmatprep.subr.mxu0 %v158
    %v160 = vand.u32 %v66, 4294901760
    %v161 = vsub.f32 %v66, %v160
    %v162 = vand.u32 %v161, 4294901760
    %v163 = vsub.f32 %v161, %v162
    %v164 = vand.u32 %v163, 4294901760
    %165 = vmatpush1.msra.mxu0 %v164
    %166 = vmatprep.subr.mxu0 0.0
    %167 = vmatpush1.msra.mxu0 0.0
    %168 = vmatprep.subr.mxu0 0.0
    %169 = vmatpush1.msra.mxu0 0.0
    %170 = vmatprep.subr.mxu0 0.0
    %171 = vmatpush1.msra.mxu0 0.0
    %172 = vmatprep.subr.mxu0 0.0
    %173 = vmatpush1.msra.mxu0 0.0
    %174 = vmatprep.subr.mxu0 0.0
    %175 = vmatpush1.msra.mxu0 0.0
    %176 = vmatprep.subr.mxu0 0.0
    %177 = vmatpush1.msra.mxu0 0.0
    %178 = vmatprep.subr.mxu0 0.0
    %179 = vmatpush1.msra.mxu0 0.0
    %180 = vmatprep.subr.mxu0 0.0
    %181 = vmatpush1.msra.mxu0 0.0
    %182 = vmatprep.subr.mxu0 0.0
    %183 = vmatpush1.msra.mxu0 0.0
    %184 = vmatprep.subr.mxu0 0.0
    %185 = vmatpush1.msra.mxu0 0.0
    %186 = vmatprep.subr.mxu0 0.0
    %187 = vmatpush1.msra.mxu0 0.0
    %188 = vmatprep.subr.mxu0 0.0
    %189 = vmatpush1.msra.mxu0 0.0
    %190 = vmatprep.subr.mxu0 0.0
    %191 = vmatpush1.msra.mxu0 0.0
    %192 = vmatprep.subr.mxu0 0.0
    %193 = vmatpush1.msra.mxu0 0.0
    %194 = vmatprep.subr.mxu0 0.0
    %195 = vmatpush1.msra.mxu0 0.0
    %196 = vmatprep.subr.mxu0 0.0
    %197 = vmatpush1.msra.mxu0 0.0
    %198 = vmatprep.subr.mxu0 0.0
    %199 = vmatpush1.msra.mxu0 0.0
    %200 = vmatprep.subr.mxu0 0.0
    %201 = vmatpush1.msra.mxu0 0.0
    %202 = vmatprep.subr.mxu0 0.0
    %203 = vmatpush1.msra.mxu0 0.0
    %204 = vmatprep.subr.mxu0 0.0
    %205 = vmatpush1.msra.mxu0 0.0
    %206 = vmatprep.subr.mxu0 0.0
    %207 = vmatpush1.msra.mxu0 0.0
    %208 = vmatprep.subr.mxu0 0.0
    %209 = vmatpush1.msra.mxu0 0.0
    %210 = vmatprep.subr.mxu0 0.0
    %211 = vmatpush1.msra.mxu0 0.0
    %212 = vmatprep.subr.mxu0 0.0
    %213 = vmatpush1.msra.mxu0 0.0
    %214 = vmatprep.subr.mxu0 0.0
    %215 = vmatpush1.msra.mxu0 0.0
    %216 = vmatprep.subr.mxu0 0.0
    %217 = vmatpush1.msra.mxu0 0.0
    %218 = vmatprep.subr.mxu0 0.0
    %219 = vmatpush1.msra.mxu0 0.0
    %220 = vmatprep.subr.mxu0 0.0
    %221 = vmatpush1.msra.mxu0 0.0
    %222 = vmatprep.subr.mxu0 0.0
    %223 = vmatpush1.msra.mxu0 0.0
    %224 = vmatprep.subr.mxu0 0.0
    %225 = vmatpush1.msra.mxu0 0.0
    %226 = vmatprep.subr.mxu0 0.0
    %227 = vmatpush1.msra.mxu0 0.0
    %228 = vmatprep.mubr.f32.mxu0 0.0
    %v229 = vand.u32 %v74, 4294901760
    %230 = vmatmul.mubr.f32.gmra.mrb[0].mxu0 %v229
    %v231 = vpop.f32.mrb[0].mxu0
    %v232 = vadd.f32 %v150, %v231
    %v233 = vpop.f32.mrb[0].mxu0
    %v234 = vadd.f32 %v152, %v233
    %235 = vdwg.mxu0
    %v236 = vand.u32 %v67, 4294901760
    %v237 = vsub.f32 %v67, %v236
    %238 = vmatprep.subr.mxu0 %v237
    %v239 = vand.u32 %v66, 4294901760
    %v240 = vsub.f32 %v66, %v239
    %241 = vmatpush1.msra.mxu0 %v240
    %242 = vmatprep.subr.mxu0 0.0
    %243 = vmatpush1.msra.mxu0 0.0
    %244 = vmatprep.subr.mxu0 0.0
    %245 = vmatpush1.msra.mxu0 0.0
    %246 = vmatprep.subr.mxu0 0.0
    %247 = vmatpush1.msra.mxu0 0.0
    %248 = vmatprep.subr.mxu0 0.0
    %249 = vmatpush1.msra.mxu0 0.0
    %250 = vmatprep.subr.mxu0 0.0
    %251 = vmatpush1.msra.mxu0 0.0
    %252 = vmatprep.subr.mxu0 0.0
    %253 = vmatpush1.msra.mxu0 0.0
    %254 = vmatprep.subr.mxu0 0.0
    %255 = vmatpush1.msra.mxu0 0.0
    %256 = vmatprep.subr.mxu0 0.0
    %257 = vmatpush1.msra.mxu0 0.0
    %258 = vmatprep.subr.mxu0 0.0
    %259 = vmatpush1.msra.mxu0 0.0
    %260 = vmatprep.subr.mxu0 0.0
    %261 = vmatpush1.msra.mxu0 0.0
    %262 = vmatprep.subr.mxu0 0.0
    %263 = vmatpush1.msra.mxu0 0.0
    %264 = vmatprep.subr.mxu0 0.0
    %265 = vmatpush1.msra.mxu0 0.0
    %266 = vmatprep.subr.mxu0 0.0
    %267 = vmatpush1.msra.mxu0 0.0
    %268 = vmatprep.subr.mxu0 0.0
    %269 = vmatpush1.msra.mxu0 0.0
    %270 = vmatprep.subr.mxu0 0.0
    %271 = vmatpush1.msra.mxu0 0.0
    %272 = vmatprep.subr.mxu0 0.0
    %273 = vmatpush1.msra.mxu0 0.0
    %274 = vmatprep.subr.mxu0 0.0
    %275 = vmatpush1.msra.mxu0 0.0
    %276 = vmatprep.subr.mxu0 0.0
    %277 = vmatpush1.msra.mxu0 0.0
    %278 = vmatprep.subr.mxu0 0.0
    %279 = vmatpush1.msra.mxu0 0.0
    %280 = vmatprep.subr.mxu0 0.0
    %281 = vmatpush1.msra.mxu0 0.0
    %282 = vmatprep.subr.mxu0 0.0
    %283 = vmatpush1.msra.mxu0 0.0
    %284 = vmatprep.subr.mxu0 0.0
    %285 = vmatpush1.msra.mxu0 0.0
    %286 = vmatprep.subr.mxu0 0.0
    %287 = vmatpush1.msra.mxu0 0.0
    %288 = vmatprep.subr.mxu0 0.0
    %289 = vmatpush1.msra.mxu0 0.0
    %290 = vmatprep.subr.mxu0 0.0
    %291 = vmatpush1.msra.mxu0 0.0
    %292 = vmatprep.subr.mxu0 0.0
    %293 = vmatpush1.msra.mxu0 0.0
    %294 = vmatprep.subr.mxu0 0.0
    %295 = vmatpush1.msra.mxu0 0.0
    %296 = vmatprep.subr.mxu0 0.0
    %297 = vmatpush1.msra.mxu0 0.0
    %298 = vmatprep.subr.mxu0 0.0
    %299 = vmatpush1.msra.mxu0 0.0
    %300 = vmatprep.subr.mxu0 0.0
    %301 = vmatpush1.msra.mxu0 0.0
    %302 = vmatprep.subr.mxu0 0.0
    %303 = vmatpush1.msra.mxu0 0.0
    %304 = vmatprep.mubr.f32.mxu0 0.0
    %v305 = vand.u32 %v74, 4294901760
    %v306 = vsub.f32 %v74, %v305
    %307 = vmatmul.mubr.f32.gmra.mrb[0].mxu0 %v306
    %v308 = vpop.f32.mrb[0].mxu0
    %v309 = vadd.f32 %v232, %v308
    %v310 = vpop.f32.mrb[0].mxu0
    %v311 = vadd.f32 %v234, %v310
    %312 = vdwg.mxu0
    %v313 = vand.u32 %v67, 4294901760
    %314 = vmatprep.subr.mxu0 %v313
    %v315 = vand.u32 %v66, 4294901760
    %316 = vmatpush1.msra.mxu0 %v315
    %317 = vmatprep.subr.mxu0 0.0
    %318 = vmatpush1.msra.mxu0 0.0
    %319 = vmatprep.subr.mxu0 0.0
    %320 = vmatpush1.msra.mxu0 0.0
    %321 = vmatprep.subr.mxu0 0.0
    %322 = vmatpush1.msra.mxu0 0.0
    %323 = vmatprep.subr.mxu0 0.0
    %324 = vmatpush1.msra.mxu0 0.0
    %325 = vmatprep.subr.mxu0 0.0
    %326 = vmatpush1.msra.mxu0 0.0
    %327 = vmatprep.subr.mxu0 0.0
    %328 = vmatpush1.msra.mxu0 0.0
    %329 = vmatprep.subr.mxu0 0.0
    %330 = vmatpush1.msra.mxu0 0.0
    %331 = vmatprep.subr.mxu0 0.0
    %332 = vmatpush1.msra.mxu0 0.0
    %333 = vmatprep.subr.mxu0 0.0
    %334 = vmatpush1.msra.mxu0 0.0
    %335 = vmatprep.subr.mxu0 0.0
    %336 = vmatpush1.msra.mxu0 0.0
    %337 = vmatprep.subr.mxu0 0.0
    %338 = vmatpush1.msra.mxu0 0.0
    %339 = vmatprep.subr.mxu0 0.0
    %340 = vmatpush1.msra.mxu0 0.0
    %341 = vmatprep.subr.mxu0 0.0
    %342 = vmatpush1.msra.mxu0 0.0
    %343 = vmatprep.subr.mxu0 0.0
    %344 = vmatpush1.msra.mxu0 0.0
    %345 = vmatprep.subr.mxu0 0.0
    %346 = vmatpush1.msra.mxu0 0.0
    %347 = vmatprep.subr.mxu0 0.0
    %348 = vmatpush1.msra.mxu0 0.0
    %349 = vmatprep.subr.mxu0 0.0
    %350 = vmatpush1.msra.mxu0 0.0
    %351 = vmatprep.subr.mxu0 0.0
    %352 = vmatpush1.msra.mxu0 0.0
    %353 = vmatprep.subr.mxu0 0.0
    %354 = vmatpush1.msra.mxu0 0.0
    %355 = vmatprep.subr.mxu0 0.0
    %356 = vmatpush1.msra.mxu0 0.0
    %357 = vmatprep.subr.mxu0 0.0
    %358 = vmatpush1.msra.mxu0 0.0
    %359 = vmatprep.subr.mxu0 0.0
    %360 = vmatpush1.msra.mxu0 0.0
    %361 = vmatprep.subr.mxu0 0.0
    %362 = vmatpush1.msra.mxu0 0.0
    %363 = vmatprep.subr.mxu0 0.0
    %364 = vmatpush1.msra.mxu0 0.0
    %365 = vmatprep.subr.mxu0 0.0
    %366 = vmatpush1.msra.mxu0 0.0
    %367 = vmatprep.subr.mxu0 0.0
    %368 = vmatpush1.msra.mxu0 0.0
    %369 = vmatprep.subr.mxu0 0.0
    %370 = vmatpush1.msra.mxu0 0.0
    %371 = vmatprep.subr.mxu0 0.0
    %372 = vmatpush1.msra.mxu0 0.0
    %373 = vmatprep.subr.mxu0 0.0
    %374 = vmatpush1.msra.mxu0 0.0
    %375 = vmatprep.subr.mxu0 0.0
    %376 = vmatpush1.msra.mxu0 0.0
    %377 = vmatprep.subr.mxu0 0.0
    %378 = vmatpush1.msra.mxu0 0.0
    %379 = vmatprep.mubr.f32.mxu0 0.0
    %v380 = vand.u32 %v74, 4294901760
    %v381 = vsub.f32 %v74, %v380
    %v382 = vand.u32 %v381, 4294901760
    %383 = vmatmul.mubr.f32.gmra.mrb[0].mxu0 %v382
    %v384 = vpop.f32.mrb[0].mxu0
    %v385 = vadd.f32 %v309, %v384
    %v386 = vpop.f32.mrb[0].mxu0
    %v387 = vadd.f32 %v311, %v386
    %388 = vdwg.mxu0
    %v389 = vand.u32 %v67, 4294901760
    %v390 = vsub.f32 %v67, %v389
    %v391 = vand.u32 %v390, 4294901760
    %392 = vmatprep.subr.mxu0 %v391
    %v393 = vand.u32 %v66, 4294901760
    %v394 = vsub.f32 %v66, %v393
    %v395 = vand.u32 %v394, 4294901760
    %396 = vmatpush1.msra.mxu0 %v395
    %397 = vmatprep.subr.mxu0 0.0
    %398 = vmatpush1.msra.mxu0 0.0
    %399 = vmatprep.subr.mxu0 0.0
    %400 = vmatpush1.msra.mxu0 0.0
    %401 = vmatprep.subr.mxu0 0.0
    %402 = vmatpush1.msra.mxu0 0.0
    %403 = vmatprep.subr.mxu0 0.0
    %404 = vmatpush1.msra.mxu0 0.0
    %405 = vmatprep.subr.mxu0 0.0
    %406 = vmatpush1.msra.mxu0 0.0
    %407 = vmatprep.subr.mxu0 0.0
    %408 = vmatpush1.msra.mxu0 0.0
    %409 = vmatprep.subr.mxu0 0.0
    %410 = vmatpush1.msra.mxu0 0.0
    %411 = vmatprep.subr.mxu0 0.0
    %412 = vmatpush1.msra.mxu0 0.0
    %413 = vmatprep.subr.mxu0 0.0
    %414 = vmatpush1.msra.mxu0 0.0
    %415 = vmatprep.subr.mxu0 0.0
    %416 = vmatpush1.msra.mxu0 0.0
    %417 = vmatprep.subr.mxu0 0.0
    %418 = vmatpush1.msra.mxu0 0.0
    %419 = vmatprep.subr.mxu0 0.0
    %420 = vmatpush1.msra.mxu0 0.0
    %421 = vmatprep.subr.mxu0 0.0
    %422 = vmatpush1.msra.mxu0 0.0
    %423 = vmatprep.subr.mxu0 0.0
    %424 = vmatpush1.msra.mxu0 0.0
    %425 = vmatprep.subr.mxu0 0.0
    %426 = vmatpush1.msra.mxu0 0.0
    %427 = vmatprep.subr.mxu0 0.0
    %428 = vmatpush1.msra.mxu0 0.0
    %429 = vmatprep.subr.mxu0 0.0
    %430 = vmatpush1.msra.mxu0 0.0
    %431 = vmatprep.subr.mxu0 0.0
    %432 = vmatpush1.msra.mxu0 0.0
    %433 = vmatprep.subr.mxu0 0.0
    %434 = vmatpush1.msra.mxu0 0.0
    %435 = vmatprep.subr.mxu0 0.0
    %436 = vmatpush1.msra.mxu0 0.0
    %437 = vmatprep.subr.mxu0 0.0
    %438 = vmatpush1.msra.mxu0 0.0
    %439 = vmatprep.subr.mxu0 0.0
    %440 = vmatpush1.msra.mxu0 0.0
    %441 = vmatprep.subr.mxu0 0.0
    %442 = vmatpush1.msra.mxu0 0.0
    %443 = vmatprep.subr.mxu0 0.0
    %444 = vmatpush1.msra.mxu0 0.0
    %445 = vmatprep.subr.mxu0 0.0
    %446 = vmatpush1.msra.mxu0 0.0
    %447 = vmatprep.subr.mxu0 0.0
    %448 = vmatpush1.msra.mxu0 0.0
    %449 = vmatprep.subr.mxu0 0.0
    %450 = vmatpush1.msra.mxu0 0.0
    %451 = vmatprep.subr.mxu0 0.0
    %452 = vmatpush1.msra.mxu0 0.0
    %453 = vmatprep.subr.mxu0 0.0
    %454 = vmatpush1.msra.mxu0 0.0
    %455 = vmatprep.subr.mxu0 0.0
    %456 = vmatpush1.msra.mxu0 0.0
    %457 = vmatprep.subr.mxu0 0.0
    %458 = vmatpush1.msra.mxu0 0.0
    %459 = vmatprep.mubr.f32.mxu0 0.0
    %v460 = vand.u32 %v74, 4294901760
    %461 = vmatmul.mubr.f32.gmra.mrb[0].mxu0 %v460
    %v462 = vpop.f32.mrb[0].mxu0
    %v463 = vadd.f32 %v385, %v462
    %v464 = vpop.f32.mrb[0].mxu0
    %v465 = vadd.f32 %v387, %v464
    %466 = vdwg.mxu0
    %v467 = vand.u32 %v67, 4294901760
    %468 = vmatprep.subr.mxu0 %v467
    %v469 = vand.u32 %v66, 4294901760
    %470 = vmatpush1.msra.mxu0 %v469
    %471 = vmatprep.subr.mxu0 0.0
    %472 = vmatpush1.msra.mxu0 0.0
    %473 = vmatprep.subr.mxu0 0.0
    %474 = vmatpush1.msra.mxu0 0.0
    %475 = vmatprep.subr.mxu0 0.0
    %476 = vmatpush1.msra.mxu0 0.0
    %477 = vmatprep.subr.mxu0 0.0
    %478 = vmatpush1.msra.mxu0 0.0
    %479 = vmatprep.subr.mxu0 0.0
    %480 = vmatpush1.msra.mxu0 0.0
    %481 = vmatprep.subr.mxu0 0.0
    %482 = vmatpush1.msra.mxu0 0.0
    %483 = vmatprep.subr.mxu0 0.0
    %484 = vmatpush1.msra.mxu0 0.0
    %485 = vmatprep.subr.mxu0 0.0
    %486 = vmatpush1.msra.mxu0 0.0
    %487 = vmatprep.subr.mxu0 0.0
    %488 = vmatpush1.msra.mxu0 0.0
    %489 = vmatprep.subr.mxu0 0.0
    %490 = vmatpush1.msra.mxu0 0.0
    %491 = vmatprep.subr.mxu0 0.0
    %492 = vmatpush1.msra.mxu0 0.0
    %493 = vmatprep.subr.mxu0 0.0
    %494 = vmatpush1.msra.mxu0 0.0
    %495 = vmatprep.subr.mxu0 0.0
    %496 = vmatpush1.msra.mxu0 0.0
    %497 = vmatprep.subr.mxu0 0.0
    %498 = vmatpush1.msra.mxu0 0.0
    %499 = vmatprep.subr.mxu0 0.0
    %500 = vmatpush1.msra.mxu0 0.0
    %501 = vmatprep.subr.mxu0 0.0
    %502 = vmatpush1.msra.mxu0 0.0
    %503 = vmatprep.subr.mxu0 0.0
    %504 = vmatpush1.msra.mxu0 0.0
    %505 = vmatprep.subr.mxu0 0.0
    %506 = vmatpush1.msra.mxu0 0.0
    %507 = vmatprep.subr.mxu0 0.0
    %508 = vmatpush1.msra.mxu0 0.0
    %509 = vmatprep.subr.mxu0 0.0
    %510 = vmatpush1.msra.mxu0 0.0
    %511 = vmatprep.subr.mxu0 0.0
    %512 = vmatpush1.msra.mxu0 0.0
    %513 = vmatprep.subr.mxu0 0.0
    %514 = vmatpush1.msra.mxu0 0.0
    %515 = vmatprep.subr.mxu0 0.0
    %516 = vmatpush1.msra.mxu0 0.0
    %517 = vmatprep.subr.mxu0 0.0
    %518 = vmatpush1.msra.mxu0 0.0
    %519 = vmatprep.subr.mxu0 0.0
    %520 = vmatpush1.msra.mxu0 0.0
    %521 = vmatprep.subr.mxu0 0.0
    %522 = vmatpush1.msra.mxu0 0.0
    %523 = vmatprep.subr.mxu0 0.0
    %524 = vmatpush1.msra.mxu0 0.0
    %525 = vmatprep.subr.mxu0 0.0
    %526 = vmatpush1.msra.mxu0 0.0
    %527 = vmatprep.subr.mxu0 0.0
    %528 = vmatpush1.msra.mxu0 0.0
    %529 = vmatprep.subr.mxu0 0.0
    %530 = vmatpush1.msra.mxu0 0.0
    %531 = vmatprep.subr.mxu0 0.0
    %532 = vmatpush1.msra.mxu0 0.0
    %533 = vmatprep.mubr.f32.mxu0 0.0
    %v534 = vand.u32 %v74, 4294901760
    %535 = vmatmul.mubr.f32.gmra.mrb[0].mxu0 %v534
    %v536 = vpop.f32.mrb[0].mxu0
    %v537 = vadd.f32 %v463, %v536
    %v538 = vpop.f32.mrb[0].mxu0
    %v539 = vadd.f32 %v465, %v538
    %540 = vdwg.mxu0
    %v541 = vsub.f32 %v537, %v47
    %v542 = vsub.f32 %v539, %v48
    %v543 = vmul.f32 %v541, %v541
    %v544 = vmul.f32 %v542, %v542
    %s545 = smul.addr %s44, 8
    %s546 = scalar_lea.vmem [#allocation7], %s545
    %547 = vst [vmem:[%s546] sm:$0xff] %v543
    %548 = vst [vmem:[%s546 + $0x8] sm:$0xff] %v544
    // Predicated region
    $region26: #{tpu_custom_call.1} parent=1 // pred_check
      _
    $region27: #{tpu_custom_call.1} parent=1 // pred_check_branch
      %550 = sbr.rel (0) target = $region29
    $region28: #{tpu_custom_call.1} parent=1 // pred_region
      %s552 = ssub.s32 256, 256
      %553 = vsyncadd [#allocation4], %s552
      %s555 = sshll.u32 [#allocation7], 4
      %s556 = int_to_ptr.vmem [resolvable:$true] %s555
      %558 = dma.vmem_to_hbm [thread:$0]  %s556, 256, %s4, [#allocation4]
    $region29: #{tpu_custom_call.1} parent=1 // pred_fallthru
      _
    // Predicated region
    $region30: #{tpu_custom_call.1} parent=1 // pred_check
      _
    $region31: #{tpu_custom_call.1} parent=1 // pred_check_branch
      %560 = sbr.rel (0) target = $region33
    $region32: #{tpu_custom_call.1} parent=1 // pred_region
      %561 = dma.done [#allocation4], 256
    $region33: #{tpu_custom_call.1} parent=1 // pred_fallthru
      _
    %562 = vsyncpa [#allocation3], 1
    %563 = vsyncpa [#allocation6], 1
    %564 = vsyncpa [#allocation4], 1

</llo_original>
